<compile_context>
chip_gen: v7x
topology: tpu7x:2x2x1
jax: 0.10.0
libtpu: 0.0.40
codegen_flags: <defaults>
</compile_context>

<pallas_src>
import functools

import jax
import jax.numpy as jnp
from jax import lax
from jax.experimental import pallas as pl
from jax.experimental.pallas import tpu as pltpu


# ------------------------------ small helpers ------------------------------

def _round_up(a, b):
    return (a + b - 1) // b * b


def _apply_activation(out, activation):
    if activation == "relu":
        return jnp.maximum(out, 0.0)
    if activation == "lrelu":
        return jnp.where(out >= 0.0, out, 0.2 * out)
    if activation == "tanh":
        return jnp.tanh(out)
    if activation == "none":
        return out
    # TODO(synk): 'prelu' / 'selu' activations and 'bn'/'in'/'ln' norms not implemented.
    raise ValueError(f"unsupported activation: {activation}")


# ------------------------------- Pallas kernels ------------------------------

def _sn_linear_kernel(x_ref, w_ref, u_ref, b_ref,
                      y_ref, u_out_ref, v_out_ref, *, activation):
    """Fused SpectralNorm(nn.Linear) + activation (one power iteration).

    x_ref: (tm, K), w_ref: (M, K) = weight_bar (VMEM-resident across row tiles),
    u_ref: (1, M), b_ref: (1, M)
    y_ref: (tm, M), u_out_ref: (1, M), v_out_ref: (1, K)   (per-row-tile copies)
    """
    tiny = jnp.float32(1e-30)  # guards rsqrt; torch adds 1e-12 to the norm (negligible)

    # ---- power iteration + sigma: always f32 (sigma scales every output element) ----
    w_f32 = w_ref[...].astype(jnp.float32)                              # (M, K)
    u = u_ref[...].astype(jnp.float32)                                  # (1, M)

    wv = jnp.dot(u, w_f32, preferred_element_type=jnp.float32)          # (1, K) = (W^T u)^T
    v = wv * lax.rsqrt(jnp.sum(wv * wv) + tiny)                         # l2normalize (EUP)
    wu = lax.dot_general(v, w_f32, (((1,), (1,)), ((), ())),
                         preferred_element_type=jnp.float32)            # (1, M) = (W v)^T
    u_new = wu * lax.rsqrt(jnp.sum(wu * wu) + tiny)                     # l2normalize
    sigma = jnp.sum(u_new * wu)                                         # u . (W v)
    inv_sigma = 1.0 / sigma                                             # exact (no approx)

    # ---- main matmul: bf16 operands on the MXU, f32 accumulator ----
    x_bf = x_ref[...].astype(jnp.bfloat16)
    w_bf = w_ref[...].astype(jnp.bfloat16)
    acc = lax.dot_general(x_bf, w_bf, (((1,), (1,)), ((), ())),
                          preferred_element_type=jnp.float32)           # (tm, M)

    # ---- epilogue in f32 (1/sigma folded as a scalar multiply on the accumulator) ----
    out = acc * inv_sigma + b_ref[...].astype(jnp.float32)
    out = _apply_activation(out, activation)

    y_ref[...] = out.astype(y_ref.dtype)
    u_out_ref[...] = u_new.astype(u_out_ref.dtype)
    v_out_ref[...] = v.astype(v_out_ref.dtype)


def _plain_linear_kernel(x_ref, w_ref, b_ref, y_ref, *, activation):
    """nn.Linear + activation (norm='none'). bf16 MXU operands, f32 epilogue."""
    acc = lax.dot_general(x_ref[...].astype(jnp.bfloat16),
                          w_ref[...].astype(jnp.bfloat16),
                          (((1,), (1,)), ((), ())),
                          preferred_element_type=jnp.float32)           # (tm, M)
    out = acc + b_ref[...].astype(jnp.float32)
    y_ref[...] = _apply_activation(out, activation).astype(y_ref.dtype)


# ------------------------------- Python wrappers ------------------------------

_COMPILER_PARAMS = pltpu.CompilerParams(
    dimension_semantics=("parallel",),        # row-tile axis: shard across v7x's 2 TCs
    vmem_limit_bytes=48 * 1024 * 1024,        # fits v7x's 64 MiB physical VMEM w/ headroom
)


def _row_tiling(n, row_tile):
    tm = min(row_tile, _round_up(n, 8))       # sublane-aligned row tile
    n_pad = _round_up(n, tm)
    return tm, n_pad


@functools.partial(jax.jit, static_argnames=("activation", "row_tile"))
def linear_block_sn(x, w_bar, u, bias, *, activation="relu", row_tile=256):
    """LinearBlock(norm='sn', activation): returns (y, u_new, v_new)."""
    N, K = x.shape
    M = w_bar.shape[0]
    w_mat = w_bar.reshape(M, -1)              # no dtype cast: native dtype into VMEM
    u2d = u.reshape(1, M)
    b2d = bias.reshape(1, M)

    tm, n_pad = _row_tiling(N, row_tile)
    grid = (n_pad // tm,)
    x_p = x if n_pad == N else jnp.pad(x, ((0, n_pad - N), (0, 0)))

    flops = 2 * n_pad * M * K + grid[0] * 4 * M * K
    bytes_accessed = (x_p.size * x_p.dtype.itemsize
                      + w_mat.size * w_mat.dtype.itemsize
                      + (n_pad * M + 2 * M + grid[0] * (M + K)) * 4)

    y, u_all, v_all = pl.pallas_call(
        functools.partial(_sn_linear_kernel, activation=activation),
        grid=grid,
        in_specs=[
            pl.BlockSpec((tm, K), lambda i: (i, 0)),        # x: row-tiled
            pl.BlockSpec((M, K), lambda i: (0, 0)),         # W: resident across tiles
            pl.BlockSpec((1, M), lambda i: (0, 0)),         # u
            pl.BlockSpec((1, M), lambda i: (0, 0)),         # bias
        ],
        out_specs=[
            pl.BlockSpec((tm, M), lambda i: (i, 0)),        # y: lane-dense full-M rows
            pl.BlockSpec((None, 1, M), lambda i: (i, 0, 0)),  # u_new per tile (identical)
            pl.BlockSpec((None, 1, K), lambda i: (i, 0, 0)),  # v_new per tile (identical)
        ],
        out_shape=(
            jax.ShapeDtypeStruct((n_pad, M), jnp.float32),
            jax.ShapeDtypeStruct((grid[0], 1, M), jnp.float32),
            jax.ShapeDtypeStruct((grid[0], 1, K), jnp.float32),
        ),
        compiler_params=_COMPILER_PARAMS,
        cost_estimate=pl.CostEstimate(flops=flops,
                                      transcendentals=2 * grid[0],
                                      bytes_accessed=bytes_accessed),
    )(x_p, w_mat, u2d, b2d)
    return y[:N], u_all[0, 0], v_all[0, 0]


@functools.partial(jax.jit, static_argnames=("activation", "row_tile"))
def linear_block_plain(x, w, bias, *, activation="relu", row_tile=256):
    """LinearBlock(norm='none', activation): returns y."""
    N, K = x.shape
    M = w.shape[0]
    b2d = bias.reshape(1, M)

    tm, n_pad = _row_tiling(N, row_tile)
    grid = (n_pad // tm,)
    x_p = x if n_pad == N else jnp.pad(x, ((0, n_pad - N), (0, 0)))

    flops = 2 * n_pad * M * K
    bytes_accessed = (x_p.size * x_p.dtype.itemsize
                      + w.size * w.dtype.itemsize
                      + (n_pad * M + M) * 4)

    y = pl.pallas_call(
        functools.partial(_plain_linear_kernel, activation=activation),
        grid=grid,
        in_specs=[
            pl.BlockSpec((tm, K), lambda i: (i, 0)),
            pl.BlockSpec((M, K), lambda i: (0, 0)),
            pl.BlockSpec((1, M), lambda i: (0, 0)),
        ],
        out_specs=pl.BlockSpec((tm, M), lambda i: (i, 0)),
        out_shape=jax.ShapeDtypeStruct((n_pad, M), jnp.float32),
        compiler_params=_COMPILER_PARAMS,
        cost_estimate=pl.CostEstimate(flops=flops, transcendentals=0,
                                      bytes_accessed=bytes_accessed),
    )(x_p, w, b2d)
    return y[:N]


# ------------------------------ pure-JAX references ------------------------------

def _act_ref(y, activation):
    if activation == "relu":
        return jnp.maximum(y, 0.0)
    if activation == "lrelu":
        return jnp.where(y >= 0.0, y, 0.2 * y)
    if activation == "tanh":
        return jnp.tanh(y)
    return y


def _reference_sn(x, w_bar, u, bias, activation="relu", matmul_dtype=jnp.float32):
    """matmul_dtype=bf16 reproduces the kernel's MXU operand precision exactly."""
    eps = 1e-12
    w = w_bar.astype(jnp.float32)
    v = w.T @ u
    v = v / (jnp.linalg.norm(v) + eps)
    u_new = w @ v
    u_new = u_new / (jnp.linalg.norm(u_new) + eps)
    sigma = u_new @ (w @ v)
    xm = x.astype(matmul_dtype).astype(jnp.float32)
    wm = w.astype(matmul_dtype).astype(jnp.float32)
    y = (xm @ wm.T) / sigma + bias
    return _act_ref(y, activation), u_new, v


def _reference_plain(x, w, bias, activation="relu", matmul_dtype=jnp.float32):
    xm = x.astype(matmul_dtype).astype(jnp.float32)
    wm = w.astype(matmul_dtype).astype(jnp.float32)
    return _act_ref(xm @ wm.T + bias, activation)


# ------------------------------------ main ------------------------------------

if __name__ == "__main__":
    key = jax.random.PRNGKey(0)
    k_x, k_w, k_u, k_v, k_b, k_x2 = jax.random.split(key, 6)

    # LinearBlock(input_dim=64, output_dim=128), batch of 8 feature vectors.
    N, input_dim, output_dim = 8, 64, 128

    x = jax.random.normal(k_x, (N, input_dim), dtype=jnp.float32)
    w_bar = jax.random.normal(k_w, (output_dim, input_dim), dtype=jnp.float32) * 0.1
    bias = jax.random.normal(k_b, (output_dim,), dtype=jnp.float32) * 0.1

    # SpectralNorm._make_params: u ~ N(0,1) of size height (=output_dim), l2-normalized.
    u0 = jax.random.normal(k_u, (output_dim,), dtype=jnp.float32)
    u0 = u0 / (jnp.linalg.norm(u0) + 1e-12)

    # --- norm='sn', activation='relu' ---
    y, u_new, v_new = linear_block_sn(x, w_bar, u0, bias, activation="relu")
    jax.block_until_ready(y)
    # matched precision (bf16 MXU operands, f32 accumulate) reference:
    y_ref, u_ref, v_ref = _reference_sn(x, w_bar, u0, bias, "relu", jnp.bfloat16)
    assert jnp.allclose(y, y_ref, atol=1e-4, rtol=1e-4), float(jnp.max(jnp.abs(y - y_ref)))
    assert jnp.allclose(u_new, u_ref, atol=1e-5, rtol=1e-5)
    assert jnp.allclose(v_new, v_ref, atol=1e-5, rtol=1e-5)
    # semantic sanity vs a full-f32 reference (bf16 operand rounding ~1e-3 rel):
    y_f32, _, _ = _reference_sn(x, w_bar, u0, bias, "relu", jnp.float32)
    assert jnp.allclose(y, y_f32, atol=3e-2, rtol=3e-2)

    # --- norm='sn', multi-tile grid path (N=512 -> 2 row tiles of 256) ---
    x_big = jax.random.normal(k_x2, (512, input_dim), dtype=jnp.float32)
    yb, ub, vb = linear_block_sn(x_big, w_bar, u0, bias, activation="relu")
    jax.block_until_ready(yb)
    yb_ref, ub_ref, vb_ref = _reference_sn(x_big, w_bar, u0, bias, "relu", jnp.bfloat16)
    assert jnp.allclose(yb, yb_ref, atol=1e-4, rtol=1e-4), float(jnp.max(jnp.abs(yb - yb_ref)))
    assert jnp.allclose(ub, ub_ref, atol=1e-5, rtol=1e-5)
    assert jnp.allclose(vb, vb_ref, atol=1e-5, rtol=1e-5)

    # --- norm='none', activation='lrelu' ---
    y2 = linear_block_plain(x, w_bar, bias, activation="lrelu")
    jax.block_until_ready(y2)
    y2_ref = _reference_plain(x, w_bar, bias, "lrelu", jnp.bfloat16)
    assert jnp.allclose(y2, y2_ref, atol=1e-4, rtol=1e-4), float(jnp.max(jnp.abs(y2 - y2_ref)))

    print("KERNEL_OK")
</pallas_src>

<mosaic_0001>
module attributes {stable_mosaic.version = 11 : i64} {
  func.func @_sn_linear_kernel(%arg0: i32, %arg1: memref<8x64xf32, #tpu.memory_space<vmem>>, %arg2: memref<128x64xf32, #tpu.memory_space<vmem>>, %arg3: memref<1x128xf32, #tpu.memory_space<vmem>>, %arg4: memref<1x128xf32, #tpu.memory_space<vmem>>, %arg5: memref<8x128xf32, #tpu.memory_space<vmem>>, %arg6: memref<1x1x128xf32, #tpu.memory_space<vmem>>, %arg7: memref<1x1x64xf32, #tpu.memory_space<vmem>>) attributes {dimension_semantics = [#tpu.dimension_semantics<parallel>], iteration_bounds = array<i64: 1>, scalar_prefetch = 0 : i64, scratch_operands = 0 : i64, tpu.core_type = #tpu.core_type<tc>, window_params = [{transform_indices = @transform_0, window_bounds = array<i64: 8, 64>}, {pipeline_mode = #tpu.pipeline_mode<synchronous>, transform_indices = @transform_1, window_bounds = array<i64: 128, 64>}, {pipeline_mode = #tpu.pipeline_mode<synchronous>, transform_indices = @transform_2, window_bounds = array<i64: 1, 128>}, {pipeline_mode = #tpu.pipeline_mode<synchronous>, transform_indices = @transform_3, window_bounds = array<i64: 1, 128>}, {transform_indices = @transform_4, window_bounds = array<i64: 8, 128>}, {transform_indices = @transform_5, window_bounds = array<i64: 1, 1, 128>}, {transform_indices = @transform_6, window_bounds = array<i64: 1, 1, 64>}]} {
    %c0 = arith.constant 0 : index
    %c0_0 = arith.constant 0 : index
    %0 = vector.load %arg2[%c0, %c0_0] : memref<128x64xf32, #tpu.memory_space<vmem>>, vector<128x64xf32>
    %c0_1 = arith.constant 0 : index
    %c0_2 = arith.constant 0 : index
    %1 = vector.load %arg3[%c0_1, %c0_2] : memref<1x128xf32, #tpu.memory_space<vmem>>, vector<1x128xf32>
    %cst = arith.constant dense<0.000000e+00> : vector<1x64xf32>
    %2 = tpu.matmul %1, %0, %cst {dimension_numbers = #tpu.dot_dimension_numbers<[1], [0], [0], [1], [0, 0, 1, 1], [], []>} : vector<1x128xf32>, vector<128x64xf32>, vector<1x64xf32> -> vector<1x64xf32>
    %3 = arith.mulf %2, %2 : vector<1x64xf32>
    %4 = vector.shape_cast %3 : vector<1x64xf32> to vector<1x1x64xf32>
    %cst_3 = arith.constant dense<0.000000e+00> : vector<1xf32>
    %5 = vector.multi_reduction <add>, %4, %cst_3 [1, 2] : vector<1x1x64xf32> to vector<1xf32>
    %6 = vector.shape_cast %5 : vector<1xf32> to vector<1x1x1xf32>
    %7 = vector.extract %6[0, 0, 0] : f32 from vector<1x1x1xf32>
    %cst_4 = arith.constant 1.000000e-30 : f32
    %8 = arith.addf %7, %cst_4 : f32
    %9 = math.rsqrt %8 : f32
    %10 = vector.broadcast %9 : f32 to vector<1x64xf32>
    %11 = arith.mulf %2, %10 : vector<1x64xf32>
    %cst_5 = arith.constant dense<0.000000e+00> : vector<1x128xf32>
    %12 = tpu.matmul %11, %0, %cst_5 {dimension_numbers = #tpu.dot_dimension_numbers<[1], [1], [0], [0], [0, 0, 1, 0], [], []>} : vector<1x64xf32>, vector<128x64xf32>, vector<1x128xf32> -> vector<1x128xf32>
    %13 = arith.mulf %12, %12 : vector<1x128xf32>
    %14 = vector.shape_cast %13 : vector<1x128xf32> to vector<1x1x128xf32>
    %cst_6 = arith.constant dense<0.000000e+00> : vector<1xf32>
    %15 = vector.multi_reduction <add>, %14, %cst_6 [1, 2] : vector<1x1x128xf32> to vector<1xf32>
    %16 = vector.shape_cast %15 : vector<1xf32> to vector<1x1x1xf32>
    %17 = vector.extract %16[0, 0, 0] : f32 from vector<1x1x1xf32>
    %cst_7 = arith.constant 1.000000e-30 : f32
    %18 = arith.addf %17, %cst_7 : f32
    %19 = math.rsqrt %18 : f32
    %20 = vector.broadcast %19 : f32 to vector<1x128xf32>
    %21 = arith.mulf %12, %20 : vector<1x128xf32>
    %22 = arith.mulf %21, %12 : vector<1x128xf32>
    %23 = vector.shape_cast %22 : vector<1x128xf32> to vector<1x1x128xf32>
    %cst_8 = arith.constant dense<0.000000e+00> : vector<1xf32>
    %24 = vector.multi_reduction <add>, %23, %cst_8 [1, 2] : vector<1x1x128xf32> to vector<1xf32>
    %25 = vector.shape_cast %24 : vector<1xf32> to vector<1x1x1xf32>
    %26 = vector.extract %25[0, 0, 0] : f32 from vector<1x1x1xf32>
    %cst_9 = arith.constant 1.000000e+00 : f32
    %27 = arith.divf %cst_9, %26 : f32
    %c0_10 = arith.constant 0 : index
    %c0_11 = arith.constant 0 : index
    %28 = vector.load %arg1[%c0_10, %c0_11] : memref<8x64xf32, #tpu.memory_space<vmem>>, vector<8x64xf32>
    %29 = arith.truncf %28 : vector<8x64xf32> to vector<8x64xbf16>
    %c0_12 = arith.constant 0 : index
    %c0_13 = arith.constant 0 : index
    %30 = vector.load %arg2[%c0_12, %c0_13] : memref<128x64xf32, #tpu.memory_space<vmem>>, vector<128x64xf32>
    %31 = arith.truncf %30 : vector<128x64xf32> to vector<128x64xbf16>
    %cst_14 = arith.constant dense<0.000000e+00> : vector<8x128xf32>
    %32 = tpu.matmul %29, %31, %cst_14 {dimension_numbers = #tpu.dot_dimension_numbers<[1], [1], [0], [0], [0, 0, 1, 0], [], []>} : vector<8x64xbf16>, vector<128x64xbf16>, vector<8x128xf32> -> vector<8x128xf32>
    %33 = vector.broadcast %27 : f32 to vector<8x128xf32>
    %34 = arith.mulf %32, %33 : vector<8x128xf32>
    %c0_15 = arith.constant 0 : index
    %c0_16 = arith.constant 0 : index
    %35 = vector.load %arg4[%c0_15, %c0_16] : memref<1x128xf32, #tpu.memory_space<vmem>>, vector<1x128xf32>
    %36 = vector.broadcast %35 : vector<1x128xf32> to vector<8x128xf32>
    %37 = arith.addf %34, %36 : vector<8x128xf32>
    %cst_17 = arith.constant 0.000000e+00 : f32
    %38 = vector.broadcast %cst_17 : f32 to vector<8x128xf32>
    %39 = arith.maximumf %37, %38 : vector<8x128xf32>
    %c0_18 = arith.constant 0 : index
    %c0_19 = arith.constant 0 : index
    %40 = vector.load %arg5[%c0_18, %c0_19] : memref<8x128xf32, #tpu.memory_space<vmem>>, vector<8x128xf32>
    tpu.vector_store %arg5[%c0_18, %c0_19], %39 {strides = array<i32>} : memref<8x128xf32, #tpu.memory_space<vmem>>, vector<8x128xf32>,
    %c0_20 = arith.constant 0 : index
    %c0_21 = arith.constant 0 : index
    %c0_22 = arith.constant 0 : index
    %41 = vector.load %arg6[%c0_20, %c0_21, %c0_22] : memref<1x1x128xf32, #tpu.memory_space<vmem>>, vector<1x1x128xf32>
    %42 = vector.shape_cast %41 : vector<1x1x128xf32> to vector<1x128xf32>
    %43 = vector.shape_cast %21 : vector<1x128xf32> to vector<1x1x128xf32>
    tpu.vector_store %arg6[%c0_20, %c0_21, %c0_22], %43 {strides = array<i32>} : memref<1x1x128xf32, #tpu.memory_space<vmem>>, vector<1x1x128xf32>,
    %c0_23 = arith.constant 0 : index
    %c0_24 = arith.constant 0 : index
    %c0_25 = arith.constant 0 : index
    %44 = vector.load %arg7[%c0_23, %c0_24, %c0_25] : memref<1x1x64xf32, #tpu.memory_space<vmem>>, vector<1x1x64xf32>
    %45 = vector.shape_cast %44 : vector<1x1x64xf32> to vector<1x64xf32>
    %46 = vector.shape_cast %11 : vector<1x64xf32> to vector<1x1x64xf32>
    tpu.vector_store %arg7[%c0_23, %c0_24, %c0_25], %46 {strides = array<i32>} : memref<1x1x64xf32, #tpu.memory_space<vmem>>, vector<1x1x64xf32>,
    return
  }
  func.func @transform_0(%arg0: i32) -> (i32, i32) {
    %c0_i32 = arith.constant 0 : i32
    %c0_i32_0 = arith.constant 0 : i32
    return %arg0, %c0_i32 : i32, i32
  }
  func.func @transform_1(%arg0: i32) -> (i32, i32) {
    %c0_i32 = arith.constant 0 : i32
    %c0_i32_0 = arith.constant 0 : i32
    %c0_i32_1 = arith.constant 0 : i32
    return %c0_i32, %c0_i32_0 : i32, i32
  }
  func.func @transform_2(%arg0: i32) -> (i32, i32) {
    %c0_i32 = arith.constant 0 : i32
    %c0_i32_0 = arith.constant 0 : i32
    %c0_i32_1 = arith.constant 0 : i32
    return %c0_i32, %c0_i32_0 : i32, i32
  }
  func.func @transform_3(%arg0: i32) -> (i32, i32) {
    %c0_i32 = arith.constant 0 : i32
    %c0_i32_0 = arith.constant 0 : i32
    %c0_i32_1 = arith.constant 0 : i32
    return %c0_i32, %c0_i32_0 : i32, i32
  }
  func.func @transform_4(%arg0: i32) -> (i32, i32) {
    %c0_i32 = arith.constant 0 : i32
    %c0_i32_0 = arith.constant 0 : i32
    return %arg0, %c0_i32 : i32, i32
  }
  func.func @transform_5(%arg0: i32) -> (i32, i32, i32) {
    %c0_i32 = arith.constant 0 : i32
    %c0_i32_0 = arith.constant 0 : i32
    %c0_i32_1 = arith.constant 0 : i32
    return %arg0, %c0_i32, %c0_i32_0 : i32, i32, i32
  }
  func.func @transform_6(%arg0: i32) -> (i32, i32, i32) {
    %c0_i32 = arith.constant 0 : i32
    %c0_i32_0 = arith.constant 0 : i32
    %c0_i32_1 = arith.constant 0 : i32
    return %arg0, %c0_i32, %c0_i32_0 : i32, i32, i32
  }
}

</mosaic_0001>

<llo_original>
// kernel: linear_block_sn.1
$region0: #{linear_block_sn.1}
  #allocation0 [shape = 'u32[]', space=smem, size = 0x4, offset = 0x4, fixed_abs, tag = 'smem constant byte address 0x4 - core index']
  #allocation1 [shape = 'u32[144,128]{1,0:T(1,128)}', space=vmem, size = 0x12000, scoped, tag = 'internal scratch']
  %s0 = inlined_call_operand.vmem [shape: f32[8,64], index: 0, kind: input, shape index: {}]
  %s1 = inlined_call_operand.vmem [shape: f32[128,64], index: 1, kind: input, shape index: {}]
  %s2 = inlined_call_operand.vmem [shape: f32[1,128], index: 2, kind: input, shape index: {}]
  %s3 = inlined_call_operand.vmem [shape: f32[1,128], index: 3, kind: input, shape index: {}]
  %s4 = inlined_call_operand.hbm [shape: f32[8,128], index: 4, kind: output, shape index: {0}]
  %s5 = inlined_call_operand.hbm [shape: f32[1,1,128], index: 5, kind: output, shape index: {1}]
  %s6 = inlined_call_operand.hbm [shape: f32[1,1,64], index: 6, kind: output, shape index: {2}]
  %7 = xla_tuple %s4, %s5, %s6
  %s8 = sld [smem:[#allocation0]]
  $region42: #{linear_block_sn.1} parent=0
    _
  %s10 = ssub.s32 1, %s8
  %s11 = scalar_select 0, %s10, %s8
  $region1: #{linear_block_sn.1} parent=0
    #allocation2 [shape = 'u8[4096]{0}', space=vmem, size = 0x1000, scoped, tag = 'output window, operand 0, single buffered']
    #allocation3 [shape = 's32[1]{0}', space=sflag, size = 0x4, scoped, tag = 'scoped memory for linear_block_sn.1']
    #allocation4 [shape = 'u8[512]{0}', space=vmem, size = 0x400, scoped, tag = 'output window, operand 1, single buffered']
    #allocation5 [shape = 's32[1]{0}', space=sflag, size = 0x4, scoped, tag = 'scoped memory for linear_block_sn.1']
    #allocation6 [shape = 'u8[512]{0}', space=vmem, size = 0x400, scoped, tag = 'output window, operand 2, single buffered']
    %12 = vsyncpa [#allocation3], 0
    %13 = vsyncpa [#allocation5], 0
    // Predicated region
    $region2: #{linear_block_sn.1} parent=1 // pred_check
      _
    $region3: #{linear_block_sn.1} parent=1 // pred_check_branch
      %15 = sbr.rel (0) target = $region5
    $region4: #{linear_block_sn.1} parent=1 // pred_region
      _
    $region5: #{linear_block_sn.1} parent=1 // pred_fallthru
      _
    // Predicated region
    $region6: #{linear_block_sn.1} parent=1 // pred_check
      _
    $region7: #{linear_block_sn.1} parent=1 // pred_check_branch
      %17 = sbr.rel (0) target = $region9
    $region8: #{linear_block_sn.1} parent=1 // pred_region
      _
    $region9: #{linear_block_sn.1} parent=1 // pred_fallthru
      _
    // Predicated region
    $region10: #{linear_block_sn.1} parent=1 // pred_check
      _
    $region11: #{linear_block_sn.1} parent=1 // pred_check_branch
      %19 = sbr.rel (0) target = $region13
    $region12: #{linear_block_sn.1} parent=1 // pred_region
      _
    $region13: #{linear_block_sn.1} parent=1 // pred_fallthru
      _
    // Predicated region
    $region14: #{linear_block_sn.1} parent=1 // pred_check
      _
    $region15: #{linear_block_sn.1} parent=1 // pred_check_branch
      %21 = sbr.rel (0) target = $region17
    $region16: #{linear_block_sn.1} parent=1 // pred_region
      _
    $region17: #{linear_block_sn.1} parent=1 // pred_fallthru
      _
    %v23 = vld [vmem:[%s1] sm:$0xff]
    %v24 = vld [vmem:[%s1 + $0x8] sm:$0xff]
    %v25 = vld [vmem:[%s1 + $0x10] sm:$0xff]
    %v26 = vld [vmem:[%s1 + $0x18] sm:$0xff]
    %v27 = vld [vmem:[%s1 + $0x20] sm:$0xff]
    %v28 = vld [vmem:[%s1 + $0x28] sm:$0xff]
    %v29 = vld [vmem:[%s1 + $0x30] sm:$0xff]
    %v30 = vld [vmem:[%s1 + $0x38] sm:$0xff]
    %v31 = vld [vmem:[%s1 + $0x40] sm:$0xff]
    %v32 = vld [vmem:[%s1 + $0x48] sm:$0xff]
    %v33 = vld [vmem:[%s1 + $0x50] sm:$0xff]
    %v34 = vld [vmem:[%s1 + $0x58] sm:$0xff]
    %v35 = vld [vmem:[%s1 + $0x60] sm:$0xff]
    %v36 = vld [vmem:[%s1 + $0x68] sm:$0xff]
    %v37 = vld [vmem:[%s1 + $0x70] sm:$0xff]
    %v38 = vld [vmem:[%s1 + $0x78] sm:$0xff]
    %v39 = vld [vmem:[%s2] sm:$0x1]
    %40 = vmatprep.subr.mxu0 0.0
    %41 = vmatpush1.msra.mxu0 %v23
    %42 = vmatprep.subr.mxu0 0.0
    %43 = vmatpush1.msra.mxu0 %v24
    %44 = vmatprep.subr.mxu0 0.0
    %45 = vmatpush1.msra.mxu0 %v25
    %46 = vmatprep.subr.mxu0 0.0
    %47 = vmatpush1.msra.mxu0 %v26
    %48 = vmatprep.subr.mxu0 0.0
    %49 = vmatpush1.msra.mxu0 %v27
    %50 = vmatprep.subr.mxu0 0.0
    %51 = vmatpush1.msra.mxu0 %v28
    %52 = vmatprep.subr.mxu0 0.0
    %53 = vmatpush1.msra.mxu0 %v29
    %54 = vmatprep.subr.mxu0 0.0
    %55 = vmatpush1.msra.mxu0 %v30
    %56 = vmatprep.subr.mxu0 0.0
    %57 = vmatpush1.msra.mxu0 %v31
    %58 = vmatprep.subr.mxu0 0.0
    %59 = vmatpush1.msra.mxu0 %v32
    %60 = vmatprep.subr.mxu0 0.0
    %61 = vmatpush1.msra.mxu0 %v33
    %62 = vmatprep.subr.mxu0 0.0
    %63 = vmatpush1.msra.mxu0 %v34
    %64 = vmatprep.subr.mxu0 0.0
    %65 = vmatpush1.msra.mxu0 %v35
    %66 = vmatprep.subr.mxu0 0.0
    %67 = vmatpush1.msra.mxu0 %v36
    %68 = vmatprep.subr.mxu0 0.0
    %69 = vmatpush1.msra.mxu0 %v37
    %70 = vmatprep.subr.mxu0 0.0
    %71 = vmatpush1.msra.mxu0 %v38
    %72 = vmatprep.subr.mxu0 0.0
    %73 = vmatpush1.msra.mxu0 0.0
    %74 = vmatprep.subr.mxu0 0.0
    %75 = vmatpush1.msra.mxu0 0.0
    %76 = vmatprep.subr.mxu0 0.0
    %77 = vmatpush1.msra.mxu0 0.0
    %78 = vmatprep.subr.mxu0 0.0
    %79 = vmatpush1.msra.mxu0 0.0
    %80 = vmatprep.subr.mxu0 0.0
    %81 = vmatpush1.msra.mxu0 0.0
    %82 = vmatprep.subr.mxu0 0.0
    %83 = vmatpush1.msra.mxu0 0.0
    %84 = vmatprep.subr.mxu0 0.0
    %85 = vmatpush1.msra.mxu0 0.0
    %86 = vmatprep.subr.mxu0 0.0
    %87 = vmatpush1.msra.mxu0 0.0
    %88 = vmatprep.subr.mxu0 0.0
    %89 = vmatpush1.msra.mxu0 0.0
    %90 = vmatprep.subr.mxu0 0.0
    %91 = vmatpush1.msra.mxu0 0.0
    %92 = vmatprep.subr.mxu0 0.0
    %93 = vmatpush1.msra.mxu0 0.0
    %94 = vmatprep.subr.mxu0 0.0
    %95 = vmatpush1.msra.mxu0 0.0
    %96 = vmatprep.subr.mxu0 0.0
    %97 = vmatpush1.msra.mxu0 0.0
    %98 = vmatprep.subr.mxu0 0.0
    %99 = vmatpush1.msra.mxu0 0.0
    %100 = vmatprep.subr.mxu0 0.0
    %101 = vmatpush1.msra.mxu0 0.0
    %102 = vmatprep.subr.mxu0 0.0
    %103 = vmatpush1.msra.mxu0 0.0
    %104 = vmatprep.mubr.f32.mxu0 0.0
    %105 = vmatmul.mubr.f32.gmra.mrb[0].mxu0 %v39
    %v106 = vpop.f32.mrb[0].mxu0
    %v107 = vadd.f32 0.0, %v106
    %v108 = vpop.f32.mrb[0].mxu0
    %109 = vdwg.mxu0
    %v110 = vmul.f32 %v107, %v107
    %vm111 = vcmask 516096
    %v112 = vsel %vm111, %v110, 0.0
    %113 = vadd.xlane.f32.xlu0 %v112
    %v114 = vpop.xlane.xlu0 %113
    %v115 = vrot.slane %v114, 4
    %v116 = vadd.f32 %v114, %v115
    %v117 = vrot.slane %v116, 2
    %v118 = vadd.f32 %v116, %v117
    %v119 = vrot.slane %v118, 1
    %v120 = vadd.f32 %v118, %v119
    %s121 = vtos %v120
    %s122 = sadd.f32 %s121, 1e-30
    %v123 = vstv %s122
    %v124 = vrsqrt.pop %v123
    %s125 = vtos %v124
    %v126 = vstv %s125
    %v127 = vmul.f32 %v107, %v126
    %vm128 = vcmask 523264
    %v130 = vsel %vm128, %v127, 0
    %v133 = vsel %vm128, %v23, 0
    %v136 = vsel %vm128, %v24, 0
    %v139 = vsel %vm128, %v25, 0
    %v142 = vsel %vm128, %v26, 0
    %v145 = vsel %vm128, %v27, 0
    %v148 = vsel %vm128, %v28, 0
    %v151 = vsel %vm128, %v29, 0
    %v154 = vsel %vm128, %v30, 0
    %v157 = vsel %vm128, %v31, 0
    %v160 = vsel %vm128, %v32, 0
    %v163 = vsel %vm128, %v33, 0
    %v166 = vsel %vm128, %v34, 0
    %v169 = vsel %vm128, %v35, 0
    %v172 = vsel %vm128, %v36, 0
    %v175 = vsel %vm128, %v37, 0
    %v178 = vsel %vm128, %v38, 0
    %180 = vmatprep.subr.mxu0 0.0
    %181 = vmatpush1.xpose.msra.mxu0 %v133
    %182 = vmatprep.subr.mxu0 0.0
    %183 = vmatpush1.xpose.msra.mxu0 %v136
    %184 = vmatprep.subr.mxu0 0.0
    %185 = vmatpush1.xpose.msra.mxu0 %v139
    %186 = vmatprep.subr.mxu0 0.0
    %187 = vmatpush1.xpose.msra.mxu0 %v142
    %188 = vmatprep.subr.mxu0 0.0
    %189 = vmatpush1.xpose.msra.mxu0 %v145
    %190 = vmatprep.subr.mxu0 0.0
    %191 = vmatpush1.xpose.msra.mxu0 %v148
    %192 = vmatprep.subr.mxu0 0.0
    %193 = vmatpush1.xpose.msra.mxu0 %v151
    %194 = vmatprep.subr.mxu0 0.0
    %195 = vmatpush1.xpose.msra.mxu0 %v154
    %196 = vmatprep.subr.mxu0 0.0
    %197 = vmatpush1.xpose.msra.mxu0 %v157
    %198 = vmatprep.subr.mxu0 0.0
    %199 = vmatpush1.xpose.msra.mxu0 %v160
    %200 = vmatprep.subr.mxu0 0.0
    %201 = vmatpush1.xpose.msra.mxu0 %v163
    %202 = vmatprep.subr.mxu0 0.0
    %203 = vmatpush1.xpose.msra.mxu0 %v166
    %204 = vmatprep.subr.mxu0 0.0
    %205 = vmatpush1.xpose.msra.mxu0 %v169
    %206 = vmatprep.subr.mxu0 0.0
    %207 = vmatpush1.xpose.msra.mxu0 %v172
    %208 = vmatprep.subr.mxu0 0.0
    %209 = vmatpush1.xpose.msra.mxu0 %v175
    %210 = vmatprep.subr.mxu0 0.0
    %211 = vmatpush1.xpose.msra.mxu0 %v178
    %212 = vmatprep.subr.mxu0 0.0
    %213 = vmatpush1.xpose.msra.mxu0 0.0
    %214 = vmatprep.subr.mxu0 0.0
    %215 = vmatpush1.xpose.msra.mxu0 0.0
    %216 = vmatprep.subr.mxu0 0.0
    %217 = vmatpush1.xpose.msra.mxu0 0.0
    %218 = vmatprep.subr.mxu0 0.0
    %219 = vmatpush1.xpose.msra.mxu0 0.0
    %220 = vmatprep.subr.mxu0 0.0
    %221 = vmatpush1.xpose.msra.mxu0 0.0
    %222 = vmatprep.subr.mxu0 0.0
    %223 = vmatpush1.xpose.msra.mxu0 0.0
    %224 = vmatprep.subr.mxu0 0.0
    %225 = vmatpush1.xpose.msra.mxu0 0.0
    %226 = vmatprep.subr.mxu0 0.0
    %227 = vmatpush1.xpose.msra.mxu0 0.0
    %228 = vmatprep.subr.mxu0 0.0
    %229 = vmatpush1.xpose.msra.mxu0 0.0
    %230 = vmatprep.subr.mxu0 0.0
    %231 = vmatpush1.xpose.msra.mxu0 0.0
    %232 = vmatprep.subr.mxu0 0.0
    %233 = vmatpush1.xpose.msra.mxu0 0.0
    %234 = vmatprep.subr.mxu0 0.0
    %235 = vmatpush1.xpose.msra.mxu0 0.0
    %236 = vmatprep.subr.mxu0 0.0
    %237 = vmatpush1.xpose.msra.mxu0 0.0
    %238 = vmatprep.subr.mxu0 0.0
    %239 = vmatpush1.xpose.msra.mxu0 0.0
    %240 = vmatprep.subr.mxu0 0.0
    %241 = vmatpush1.xpose.msra.mxu0 0.0
    %242 = vmatprep.subr.mxu0 0.0
    %243 = vmatpush1.xpose.msra.mxu0 0.0
    %244 = vmatprep.mubr.f32.mxu0 0.0
    %245 = vmatmul.mubr.f32.gmra.mrb[0].mxu0 %v130
    %v246 = vpop.f32.mrb[0].mxu0
    %v247 = vadd.f32 0.0, %v246
    %v248 = vpop.f32.mrb[0].mxu0
    %249 = vdwg.mxu0
    %v250 = vmul.f32 %v247, %v247
    %vm251 = vcmask 1040384
    %v252 = vsel %vm251, %v250, 0.0
    %253 = vadd.xlane.f32.xlu0 %v252
    %v254 = vpop.xlane.xlu0 %253
    %v255 = vrot.slane %v254, 4
    %v256 = vadd.f32 %v254, %v255
    %v257 = vrot.slane %v256, 2
    %v258 = vadd.f32 %v256, %v257
    %v259 = vrot.slane %v258, 1
    %v260 = vadd.f32 %v258, %v259
    %s261 = vtos %v260
    %s262 = sadd.f32 %s261, 1e-30
    %v263 = vstv %s262
    %v264 = vrsqrt.pop %v263
    %s265 = vtos %v264
    %v266 = vstv %s265
    %v267 = vmul.f32 %v247, %v266
    %v268 = vmul.f32 %v267, %v247
    %v269 = vsel %vm251, %v268, 0.0
    %270 = vadd.xlane.f32.xlu0 %v269
    %v271 = vpop.xlane.xlu0 %270
    %v272 = vrot.slane %v271, 4
    %v273 = vadd.f32 %v271, %v272
    %v274 = vrot.slane %v273, 2
    %v275 = vadd.f32 %v273, %v274
    %v276 = vrot.slane %v275, 1
    %v277 = vadd.f32 %v275, %v276
    %s278 = vtos %v277
    %v279 = vstv %s278
    %v280 = vrcp.pop %v279
    %s281 = vtos %v280
    %v282 = vld [vmem:[%s0] sm:$0xff]
    %v283 = vpack.c.bf16 %v282, %v282
    %v284 = vpack.c.bf16 %v24, %v23
    %v285 = vpack.c.bf16 %v26, %v25
    %v286 = vpack.c.bf16 %v28, %v27
    %v287 = vpack.c.bf16 %v30, %v29
    %v288 = vpack.c.bf16 %v32, %v31
    %v289 = vpack.c.bf16 %v34, %v33
    %v290 = vpack.c.bf16 %v36, %v35
    %v291 = vpack.c.bf16 %v38, %v37
    %v293 = vsel %vm128, %v283, 0
    %v296 = vsel %vm128, %v284, 0
    %v299 = vsel %vm128, %v285, 0
    %v302 = vsel %vm128, %v286, 0
    %v305 = vsel %vm128, %v287, 0
    %v308 = vsel %vm128, %v288, 0
    %v311 = vsel %vm128, %v289, 0
    %v314 = vsel %vm128, %v290, 0
    %v317 = vsel %vm128, %v291, 0
    %319 = vmatprep.subr.bf16.mxu0 0
    %320 = vmatpush1.bf16.xpose.msra.mxu0 %v296
    %321 = vmatprep.subr.bf16.mxu0 0
    %322 = vmatpush1.bf16.xpose.msra.mxu0 %v299
    %323 = vmatprep.subr.bf16.mxu0 0
    %324 = vmatpush1.bf16.xpose.msra.mxu0 %v302
    %325 = vmatprep.subr.bf16.mxu0 0
    %326 = vmatpush1.bf16.xpose.msra.mxu0 %v305
    %327 = vmatprep.subr.bf16.mxu0 0
    %328 = vmatpush1.bf16.xpose.msra.mxu0 %v308
    %329 = vmatprep.subr.bf16.mxu0 0
    %330 = vmatpush1.bf16.xpose.msra.mxu0 %v311
    %331 = vmatprep.subr.bf16.mxu0 0
    %332 = vmatpush1.bf16.xpose.msra.mxu0 %v314
    %333 = vmatprep.subr.bf16.mxu0 0
    %334 = vmatpush1.bf16.xpose.msra.mxu0 %v317
    %335 = vmatprep.subr.bf16.mxu0 0
    %336 = vmatpush1.bf16.xpose.msra.mxu0 0
    %337 = vmatprep.subr.bf16.mxu0 0
    %338 = vmatpush1.bf16.xpose.msra.mxu0 0
    %339 = vmatprep.subr.bf16.mxu0 0
    %340 = vmatpush1.bf16.xpose.msra.mxu0 0
    %341 = vmatprep.subr.bf16.mxu0 0
    %342 = vmatpush1.bf16.xpose.msra.mxu0 0
    %343 = vmatprep.subr.bf16.mxu0 0
    %344 = vmatpush1.bf16.xpose.msra.mxu0 0
    %345 = vmatprep.subr.bf16.mxu0 0
    %346 = vmatpush1.bf16.xpose.msra.mxu0 0
    %347 = vmatprep.subr.bf16.mxu0 0
    %348 = vmatpush1.bf16.xpose.msra.mxu0 0
    %349 = vmatprep.subr.bf16.mxu0 0
    %350 = vmatpush1.bf16.xpose.msra.mxu0 0
    %351 = vmatprep.mubr.bf16.mxu0 0
    %352 = vmatmul.mubr.bf16.gmra.mrb[0].mxu0 %v293
    %v353 = vpop.f32.mrb[0].mxu0
    %v354 = vadd.f32 0.0, %v353
    %v355 = vpop.f32.mrb[0].mxu0
    %v356 = vpop.f32.mrb[0].mxu0
    %v357 = vpop.f32.mrb[0].mxu0
    %358 = vdwg.mxu0
    %v359 = vstv %s281
    %v360 = vmul.f32 %v354, %v359
    %v361 = vld [vmem:[%s3] sm:$0x1]
    %v363 = vlaneseq
    %v364 = vshrl.u32 %v363, 7
    %v365 = vsub.s32 0, %v364
    %v366 = vrot.slane %v361, %v365
    %v368 = vadd.f32 %v360, %v366
    %v369 = vmax.f32 %v368, 0.0
    %370 = vst [vmem:[#allocation2] sm:$0xff] %v369
    %371 = vst [vmem:[#allocation4] sm:$0x1] %v267
    %372 = vst.msk [vmem:[#allocation6] sm:$0x1] %vm111, %v127
    // Predicated region
    $region18: #{linear_block_sn.1} parent=1 // pred_check
      _
    $region19: #{linear_block_sn.1} parent=1 // pred_check_branch
      %374 = sbr.rel (0) target = $region21
    $region20: #{linear_block_sn.1} parent=1 // pred_region
      %s376 = ssub.s32 128, 128
      %377 = vsyncadd [#allocation3], %s376
      %s379 = sshll.u32 [#allocation2], 4
      %s380 = int_to_ptr.vmem [resolvable:$true] %s379
      %382 = dma.vmem_to_hbm [thread:$0]  %s380, 128, %s4, [#allocation3]
    $region21: #{linear_block_sn.1} parent=1 // pred_fallthru
      _
    // Predicated region
    $region22: #{linear_block_sn.1} parent=1 // pred_check
      _
    $region23: #{linear_block_sn.1} parent=1 // pred_check_branch
      %384 = sbr.rel (0) target = $region25
    $region24: #{linear_block_sn.1} parent=1 // pred_region
      %s386 = ssub.s32 16, 16
      %387 = vsyncadd [#allocation5], %s386
      %s389 = sshll.u32 [#allocation4], 4
      %s390 = int_to_ptr.vmem [resolvable:$true] %s389
      %392 = dma.vmem_to_hbm [thread:$0]  %s390, 16, %s5, [#allocation5]
    $region25: #{linear_block_sn.1} parent=1 // pred_fallthru
      _
    // Predicated region
    $region26: #{linear_block_sn.1} parent=1 // pred_check
      _
    $region27: #{linear_block_sn.1} parent=1 // pred_check_branch
      %394 = sbr.rel (0) target = $region29
    $region28: #{linear_block_sn.1} parent=1 // pred_region
      %s396 = ssub.s32 16, 16
      %397 = vsyncadd [#allocation5], %s396
      %s399 = sshll.u32 [#allocation6], 4
      %s400 = int_to_ptr.vmem [resolvable:$true] %s399
      %402 = dma.vmem_to_hbm [thread:$0]  %s400, 16, %s6, [#allocation5]
    $region29: #{linear_block_sn.1} parent=1 // pred_fallthru
      _
    // Predicated region
    $region30: #{linear_block_sn.1} parent=1 // pred_check
      _
    $region31: #{linear_block_sn.1} parent=1 // pred_check_branch
      %404 = sbr.rel (0) target = $region33
    $region32: #{linear_block_sn.1} parent=1 // pred_region
      %405 = dma.done [#allocation3], 128
    $region33: #{linear_block_sn.1} parent=1 // pred_fallthru
      _
    // Predicated region
    $region34: #{linear_block_sn.1} parent=1 // pred_check
      _
    $region35: #{linear_block_sn.1} parent=1 // pred_check_branch
      %407 = sbr.rel (0) target = $region37
    $region36: #{linear_block_sn.1} parent=1 // pred_region
      %408 = dma.done [#allocation5], 16
    $region37: #{linear_block_sn.1} parent=1 // pred_fallthru
      _
    // Predicated region
    $region38: #{linear_block_sn.1} parent=1 // pred_check
      _
    $region39: #{linear_block_sn.1} parent=1 // pred_check_branch
      %410 = sbr.rel (0) target = $region41
    $region40: #{linear_block_sn.1} parent=1 // pred_region
      %411 = dma.done [#allocation5], 16
    $region41: #{linear_block_sn.1} parent=1 // pred_fallthru
      _
    %412 = vsyncpa [#allocation3], 1
    %413 = vsyncpa [#allocation5], 1

</llo_original>
